<compile_context>
chip_gen: v7x
topology: tpu7x:2x2x1
jax: 0.10.0
libtpu: 0.0.40
codegen_flags: <defaults>
</compile_context>

<pallas_src>
import functools

import jax
import jax.numpy as jnp
from jax.experimental import pallas as pl
from jax.experimental.pallas import tpu as pltpu


def _convT_matmul_relu_kernel(x_ref, w_ref, b_ref, o_ref):
    # x_ref: (K, tm)      transposed patch columns for this tile (bf16)
    # w_ref: (C_out, K)   resident across the whole grid (constant index_map)
    # b_ref: (C_out, 1)   f32
    # o_ref: (C_out, tm)  lane-dense along tm
    acc = jnp.dot(w_ref[...], x_ref[...], preferred_element_type=jnp.float32)
    acc = acc + b_ref[...].astype(jnp.float32)       # (C_out, 1) broadcast over lanes
    o_ref[...] = jnp.maximum(acc, 0.0).astype(o_ref.dtype)


def _pick_tile(m_sp, k, c_out, in_itemsize, out_itemsize, tm_max, vmem_budget):
    """Largest lane tile that (a) keeps double-buffered VMEM under budget and
    (b) divides m_sp when possible (so no padding copy is needed)."""
    per_col = 2 * (k * in_itemsize + c_out * out_itemsize)   # double-buffered bytes/column
    cap = max(128, (vmem_budget // per_col) // 128 * 128)
    tm_max = min(tm_max, cap)
    if m_sp <= tm_max:
        return m_sp                      # single full-extent tile (OK even if not %128)
    hi = tm_max - tm_max % 128
    for tm in range(hi, 127, -128):      # prefer an exact divisor -> zero padding
        if m_sp % tm == 0:
            return tm
    return hi                            # ragged: pad only up to one tile


def downsampling_conv_block(x, weight, bias, stride=2, *,
                            tm_max=2048,
                            compute_dtype=jnp.bfloat16,
                            vmem_budget=12 * 1024 * 1024):
    """relu(conv3d(x, weight, bias, kernel=stride, stride=stride, padding=0)).

    x: (N, C_in, D, H, W); weight: (C_out, C_in, s, s, s); bias: (C_out,).
    Returns (N, C_out, D//s, H//s, W//s), matching the PyTorch module.
    """
    N, C_in, D, H, W = x.shape
    C_out = weight.shape[0]
    s = stride
    Do, Ho, Wo = D // s, H // s, W // s
    M_sp = Do * Ho * Wo                  # output voxels per batch element
    K = C_in * s * s * s                 # flattened patch size
    out_dtype = x.dtype

    # ---- glue (single pass): per-batch transposed patch matrix X^T : (N, K, M_sp) ----
    # K ordered (C_in, sd, sh, sw) to match weight.reshape(C_out, -1); M ordered
    # (Do, Ho, Wo) so the kernel output reshapes to NCDHW for free (no output transpose).
    # TODO(synk): this remaining transpose could be folded into the kernel with
    # memory_space=pl.ANY + manual strided DMA over the eight (sd, sh, sw) sub-lattices.
    xp = x.reshape(N, C_in, Do, s, Ho, s, Wo, s)
    xp = jnp.transpose(xp, (0, 1, 3, 5, 7, 2, 4, 6))        # (N, C_in, s,s,s, Do,Ho,Wo)
    xt = xp.reshape(N, K, M_sp).astype(compute_dtype)       # bf16 cast fuses w/ transpose

    wm = weight.reshape(C_out, K).astype(compute_dtype)     # (C_out, K), stays resident
    bm = bias.reshape(C_out, 1).astype(jnp.float32)

    in_itemsize = jnp.dtype(compute_dtype).itemsize
    out_itemsize = jnp.dtype(out_dtype).itemsize
    tm = _pick_tile(M_sp, K, C_out, in_itemsize, out_itemsize, tm_max, vmem_budget)

    # keep >= 2 parallel grid steps so both v7x TensorCores get work
    if N * pl.cdiv(M_sp, tm) < 2 and M_sp >= 256:
        tm = pl.cdiv(pl.cdiv(M_sp, 2), 128) * 128

    M_pad = pl.cdiv(M_sp, tm) * tm
    if M_pad != M_sp:                    # only when the spatial axis is ragged w.r.t. tm
        xt = jnp.pad(xt, ((0, 0), (0, 0), (0, M_pad - M_sp)))

    grid = (N, M_pad // tm)

    cost = pl.CostEstimate(
        flops=2 * N * M_sp * K * C_out,
        transcendentals=0,
        bytes_accessed=(N * K * M_pad * in_itemsize
                        + C_out * K * in_itemsize
                        + N * C_out * M_pad * out_itemsize),
    )

    out = pl.pallas_call(
        _convT_matmul_relu_kernel,
        out_shape=jax.ShapeDtypeStruct((N, C_out, M_pad), out_dtype),
        grid_spec=pltpu.PrefetchScalarGridSpec(
            num_scalar_prefetch=0,
            grid=grid,
            in_specs=[
                pl.BlockSpec((None, K, tm), lambda n, i: (n, 0, i)),    # X^T tile
                pl.BlockSpec((C_out, K), lambda n, i: (0, 0)),          # weight (resident)
                pl.BlockSpec((C_out, 1), lambda n, i: (0, 0)),          # bias   (resident)
            ],
            out_specs=pl.BlockSpec((None, C_out, tm), lambda n, i: (n, 0, i)),
        ),
        compiler_params=pltpu.CompilerParams(
            dimension_semantics=("parallel", "parallel")),
        cost_estimate=cost,
    )(xt, wm, bm)

    if M_pad != M_sp:
        out = out[:, :, :M_sp]
    return out.reshape(N, C_out, Do, Ho, Wo)     # free reshape: already channel-major


def _reference(x, weight, bias, stride=2):
    # XLA reference conv for correctness check (NCDHW / OIDHW).
    y = jax.lax.conv_general_dilated(
        x, weight,
        window_strides=(stride,) * 3,
        padding="VALID",
        dimension_numbers=("NCDHW", "OIDHW", "NCDHW"),
        precision=jax.lax.Precision.HIGHEST,
    )
    return jnp.maximum(y + bias.reshape(1, -1, 1, 1, 1), 0.0)


if __name__ == "__main__":
    key = jax.random.PRNGKey(0)
    k_x, k_w, k_b = jax.random.split(key, 3)

    # small shapes consistent with the module
    N, C_in, C_out, stride = 2, 4, 8, 2
    D = H = W = 16                        # -> output spatial 8x8x8 (M_sp = 512, lane-dense)

    x = jax.random.normal(k_x, (N, C_in, D, H, W), dtype=jnp.float32)
    fan_in = C_in * stride ** 3
    weight = jax.random.normal(k_w, (C_out, C_in, stride, stride, stride),
                               dtype=jnp.float32) / jnp.sqrt(fan_in)
    bias = jax.random.normal(k_b, (C_out,), dtype=jnp.float32) * 0.1

    fn = jax.jit(functools.partial(downsampling_conv_block, stride=stride))
    out = jax.block_until_ready(fn(x, weight, bias))
    assert out.shape == (N, C_out, D // stride, H // stride, W // stride), out.shape

    # Tight check: reference fed the same bf16-quantized operands the kernel sees,
    # so the only difference is f32 accumulation order.
    x_q = x.astype(jnp.bfloat16).astype(jnp.float32)
    w_q = weight.astype(jnp.bfloat16).astype(jnp.float32)
    ref_q = _reference(x_q, w_q, bias, stride=stride)
    assert jnp.allclose(out, ref_q, atol=1e-3, rtol=1e-3), \
        float(jnp.max(jnp.abs(out - ref_q)))

    # Loose sanity check vs full-f32 reference (bf16 input quantization error only).
    ref = _reference(x, weight, bias, stride=stride)
    assert jnp.allclose(out, ref, atol=5e-2, rtol=5e-2), \
        float(jnp.max(jnp.abs(out - ref)))

    print("KERNEL_OK")
</pallas_src>

<mosaic_0001>
module attributes {stable_mosaic.version = 11 : i64} {
  func.func @_convT_matmul_relu_kernel(%arg0: i32, %arg1: i32, %arg2: memref<1x32x512xbf16, #tpu.memory_space<vmem>>, %arg3: memref<8x32xbf16, #tpu.memory_space<vmem>>, %arg4: memref<8x1xf32, #tpu.memory_space<vmem>>, %arg5: memref<1x8x512xf32, #tpu.memory_space<vmem>>) attributes {dimension_semantics = [#tpu.dimension_semantics<parallel>, #tpu.dimension_semantics<parallel>], iteration_bounds = array<i64: 2, 1>, scalar_prefetch = 0 : i64, scratch_operands = 0 : i64, tpu.core_type = #tpu.core_type<tc>, window_params = [{transform_indices = @transform_0, window_bounds = array<i64: 1, 32, 512>}, {pipeline_mode = #tpu.pipeline_mode<synchronous>, transform_indices = @transform_1, window_bounds = array<i64: 8, 32>}, {pipeline_mode = #tpu.pipeline_mode<synchronous>, transform_indices = @transform_2, window_bounds = array<i64: 8, 1>}, {transform_indices = @transform_3, window_bounds = array<i64: 1, 8, 512>}]} {
    %c0 = arith.constant 0 : index
    %c0_0 = arith.constant 0 : index
    %0 = vector.load %arg3[%c0, %c0_0] : memref<8x32xbf16, #tpu.memory_space<vmem>>, vector<8x32xbf16>
    %c0_1 = arith.constant 0 : index
    %c0_2 = arith.constant 0 : index
    %c0_3 = arith.constant 0 : index
    %1 = vector.load %arg2[%c0_1, %c0_2, %c0_3] : memref<1x32x512xbf16, #tpu.memory_space<vmem>>, vector<1x32x512xbf16>
    %2 = vector.shape_cast %1 : vector<1x32x512xbf16> to vector<32x512xbf16>
    %cst = arith.constant dense<0.000000e+00> : vector<8x512xf32>
    %3 = tpu.matmul %0, %2, %cst {dimension_numbers = #tpu.dot_dimension_numbers<[1], [0], [0], [1], [0, 0, 1, 1], [], []>} : vector<8x32xbf16>, vector<32x512xbf16>, vector<8x512xf32> -> vector<8x512xf32>
    %c0_4 = arith.constant 0 : index
    %c0_5 = arith.constant 0 : index
    %4 = vector.load %arg4[%c0_4, %c0_5] : memref<8x1xf32, #tpu.memory_space<vmem>>, vector<8x1xf32>
    %5 = vector.broadcast %4 : vector<8x1xf32> to vector<8x512xf32>
    %6 = arith.addf %3, %5 : vector<8x512xf32>
    %cst_6 = arith.constant 0.000000e+00 : f32
    %7 = vector.broadcast %cst_6 : f32 to vector<8x512xf32>
    %8 = arith.maximumf %6, %7 : vector<8x512xf32>
    %c0_7 = arith.constant 0 : index
    %c0_8 = arith.constant 0 : index
    %c0_9 = arith.constant 0 : index
    %9 = vector.load %arg5[%c0_7, %c0_8, %c0_9] : memref<1x8x512xf32, #tpu.memory_space<vmem>>, vector<1x8x512xf32>
    %10 = vector.shape_cast %9 : vector<1x8x512xf32> to vector<8x512xf32>
    %11 = vector.shape_cast %8 : vector<8x512xf32> to vector<1x8x512xf32>
    tpu.vector_store %arg5[%c0_7, %c0_8, %c0_9], %11 {strides = array<i32>} : memref<1x8x512xf32, #tpu.memory_space<vmem>>, vector<1x8x512xf32>,
    return
  }
  func.func @transform_0(%arg0: i32, %arg1: i32) -> (i32, i32, i32) {
    %c0_i32 = arith.constant 0 : i32
    %c0_i32_0 = arith.constant 0 : i32
    return %arg0, %c0_i32, %arg1 : i32, i32, i32
  }
  func.func @transform_1(%arg0: i32, %arg1: i32) -> (i32, i32) {
    %c0_i32 = arith.constant 0 : i32
    %c0_i32_0 = arith.constant 0 : i32
    %c0_i32_1 = arith.constant 0 : i32
    return %c0_i32, %c0_i32_0 : i32, i32
  }
  func.func @transform_2(%arg0: i32, %arg1: i32) -> (i32, i32) {
    %c0_i32 = arith.constant 0 : i32
    %c0_i32_0 = arith.constant 0 : i32
    %c0_i32_1 = arith.constant 0 : i32
    return %c0_i32, %c0_i32_0 : i32, i32
  }
  func.func @transform_3(%arg0: i32, %arg1: i32) -> (i32, i32, i32) {
    %c0_i32 = arith.constant 0 : i32
    %c0_i32_0 = arith.constant 0 : i32
    return %arg0, %c0_i32, %arg1 : i32, i32, i32
  }
}

</mosaic_0001>

<llo_original>
// kernel: downsampling_conv_block.1
$region0: #{downsampling_conv_block.1}
  #allocation0 [shape = 'u32[]', space=smem, size = 0x4, offset = 0x4, fixed_abs, tag = 'smem constant byte address 0x4 - core index']
  #allocation1 [shape = 'u32[144,128]{1,0:T(1,128)}', space=vmem, size = 0x12000, scoped, tag = 'internal scratch']
  %s0 = inlined_call_operand.vmem [shape: bf16[2,32,512], index: 0, kind: input, shape index: {}]
  %s1 = inlined_call_operand.vmem [shape: bf16[8,32], index: 1, kind: input, shape index: {}]
  %s2 = inlined_call_operand.vmem [shape: f32[8,1], index: 2, kind: input, shape index: {}]
  %s3 = inlined_call_operand.vmem [shape: f32[2,8,512], index: 3, kind: output, shape index: {}]
  %s4 = sld [smem:[#allocation0]]
  $region45: #{downsampling_conv_block.1} parent=0
    _
  %s6 = ssub.s32 1, %s4
  %s7 = scalar_select 0, %s6, %s4
  loop: start=0, step=1, limit=4
  $region2: #{downsampling_conv_block.1} parent=0 // loop_pre_header
    _
  $region3: #{downsampling_conv_block.1} parent=0 // loop_header
    %s9 = sphi 0, %s13
    %p10 = scmp.ge.s32.totalorder %s9, 4
    %s16 = sphi 0, %s28
    %s17 = sphi 0, %s24
    %s18 = sphi 0, %s16
    %s19 = sphi 0, %s17
    %s20 = sphi 0, %s18
    %s21 = sphi 0, %s19
    %s33 = sphi 0, %s35
    %s36 = sphi 0, %s33
    %s37 = sphi 0, %s36
    %s53 = sphi 0, %s37
    %s57 = sphi 0, %s57
    %s59 = sphi 0, %s57
    %s60 = sphi 0, %s59
    %s74 = sphi 0, %s60
    %s78 = sphi 0, %s78
    %s80 = sphi 0, %s78
    %s81 = sphi 0, %s80
    %s95 = sphi 0, %s81
    %s103 = sphi 0, %s105
    %s106 = sphi 0, %s103
    %s107 = sphi 0, %s106
    %s123 = sphi 0, %s107
  $region4: #{downsampling_conv_block.1} parent=0 // loop_header_branch
    %12 = sbr.rel (%p10) target = $region8
  $region5: #{downsampling_conv_block.1} parent=0 // loop_body
    %s14 = ssub.s32 %s9, 1
    %s15 = ssub.s32 %s9, 2
    %s22 = sadd.s32 1, %s17
    %p23 = scmp.ge.s32.totalorder %s22, 1
    %s24 = scalar_select %p23, 0, %s22
    %s25 = sadd.s32 1, %s16
    %s26 = scalar_select %p23, %s25, %s16
    %p27 = scmp.ge.s32.totalorder %s26, 2
    %s28 = scalar_select %p27, 0, %s26
    %s29 = ssub.s32 %s16, %s28
    %s30 = ssub.s32 %s17, %s24
    %s31 = sor.u32 %s29, %s30
    %p32 = scmp.eq.s32.totalorder %s31, 0
    %s34 = sadd.s32 %s33, 1
    %s35 = scalar_select %p32, %s33, %s34
    %p38 = pneg %p32
    %p39 = scmp.eq.s32.totalorder %s9, 1
    %p40 = por %p38, %p39
    %p41 = scmp.ne.s32.totalorder %s33, %s36
    %p42 = scmp.eq.s32.totalorder %s9, 0
    %p43 = por %p41, %p42
    %p44 = scmp.ne.s32.totalorder %s33, %s36
    %p45 = scmp.eq.s32.totalorder %s14, 1
    %p46 = por %p44, %p45
    %p47 = scmp.ne.s32.totalorder %s36, %s37
    %p48 = scmp.eq.s32.totalorder %s14, 0
    %p49 = por %p47, %p48
    %p50 = scmp.ne.s32.totalorder %s36, %s37
    %p51 = scmp.eq.s32.totalorder %s15, 1
    %p52 = por %p50, %p51
    %p54 = scmp.ne.s32.totalorder %s37, %s53
    %p55 = scmp.eq.s32.totalorder %s15, 0
    %p56 = por %p54, %p55
    %s58 = sadd.s32 %s57, 1
    %p61 = scmp.eq.s32.totalorder %s9, 1
    %p62 = scmp.ne.s32.totalorder %s57, %s59
    %p63 = scmp.eq.s32.totalorder %s9, 0
    %p64 = por %p62, %p63
    %p65 = scmp.ne.s32.totalorder %s57, %s59
    %p66 = scmp.eq.s32.totalorder %s14, 1
    %p67 = por %p65, %p66
    %p68 = scmp.ne.s32.totalorder %s59, %s60
    %p69 = scmp.eq.s32.totalorder %s14, 0
    %p70 = por %p68, %p69
    %p71 = scmp.ne.s32.totalorder %s59, %s60
    %p72 = scmp.eq.s32.totalorder %s15, 1
    %p73 = por %p71, %p72
    %p75 = scmp.ne.s32.totalorder %s60, %s74
    %p76 = scmp.eq.s32.totalorder %s15, 0
    %p77 = por %p75, %p76
    %s79 = sadd.s32 %s78, 1
    %p82 = scmp.eq.s32.totalorder %s9, 1
    %p83 = scmp.ne.s32.totalorder %s78, %s80
    %p84 = scmp.eq.s32.totalorder %s9, 0
    %p85 = por %p83, %p84
    %p86 = scmp.ne.s32.totalorder %s78, %s80
    %p87 = scmp.eq.s32.totalorder %s14, 1
    %p88 = por %p86, %p87
    %p89 = scmp.ne.s32.totalorder %s80, %s81
    %p90 = scmp.eq.s32.totalorder %s14, 0
    %p91 = por %p89, %p90
    %p92 = scmp.ne.s32.totalorder %s80, %s81
    %p93 = scmp.eq.s32.totalorder %s15, 1
    %p94 = por %p92, %p93
    %p96 = scmp.ne.s32.totalorder %s81, %s95
    %p97 = scmp.eq.s32.totalorder %s15, 0
    %p98 = por %p96, %p97
    %s99 = ssub.s32 %s16, %s28
    %s100 = ssub.s32 %s17, %s24
    %s101 = sor.u32 %s99, %s100
    %p102 = scmp.eq.s32.totalorder %s101, 0
    %s104 = sadd.s32 %s103, 1
    %s105 = scalar_select %p102, %s103, %s104
    %p108 = pneg %p102
    %p109 = scmp.eq.s32.totalorder %s9, 1
    %p110 = por %p108, %p109
    %p111 = scmp.ne.s32.totalorder %s103, %s106
    %p112 = scmp.eq.s32.totalorder %s9, 0
    %p113 = por %p111, %p112
    %p114 = scmp.ne.s32.totalorder %s103, %s106
    %p115 = scmp.eq.s32.totalorder %s14, 1
    %p116 = por %p114, %p115
    %p117 = scmp.ne.s32.totalorder %s106, %s107
    %p118 = scmp.eq.s32.totalorder %s14, 0
    %p119 = por %p117, %p118
    %p120 = scmp.ne.s32.totalorder %s106, %s107
    %p121 = scmp.eq.s32.totalorder %s15, 1
    %p122 = por %p120, %p121
    %p124 = scmp.ne.s32.totalorder %s107, %s123
    %p125 = scmp.eq.s32.totalorder %s15, 0
    %p126 = por %p124, %p125
    %p127 = scmp.le.s32.totalorder 1, %s9
    %p128 = scmp.lt.s32.totalorder %s9, 3
    %p129 = pnand %p127, %p128
    %p130 = pneg %p129
    // Predicated region
    $region9: #{downsampling_conv_block.1} parent=5 // pred_check
      _
    $region10: #{downsampling_conv_block.1} parent=5 // pred_check_branch
      %132 = sbr.rel (%p129) target = $region12
    $region11: #{downsampling_conv_block.1} parent=5 // pred_region
      %s133 = ssub.s32 %s9, 1
      // Predicated region
      $region13: #{downsampling_conv_block.1} parent=11 // pred_check
        %p134 = pneg %p70
      $region14: #{downsampling_conv_block.1} parent=11 // pred_check_branch
        %136 = sbr.rel (%p134) target = $region16
      $region15: #{downsampling_conv_block.1} parent=11 // pred_region
        _
      $region16: #{downsampling_conv_block.1} parent=11 // pred_fallthru
        _
      // Predicated region
      $region17: #{downsampling_conv_block.1} parent=11 // pred_check
        %p137 = pneg %p91
      $region18: #{downsampling_conv_block.1} parent=11 // pred_check_branch
        %139 = sbr.rel (%p137) target = $region20
      $region19: #{downsampling_conv_block.1} parent=11 // pred_region
        _
      $region20: #{downsampling_conv_block.1} parent=11 // pred_fallthru
        _
    $region12: #{downsampling_conv_block.1} parent=5 // pred_fallthru
      _
    %p140 = scmp.lt.s32.totalorder %s9, 2
    // Predicated region
    $region21: #{downsampling_conv_block.1} parent=5 // pred_check
      %p141 = pneg %p140
    $region22: #{downsampling_conv_block.1} parent=5 // pred_check_branch
      %143 = sbr.rel (%p141) target = $region24
    $region23: #{downsampling_conv_block.1} parent=5 // pred_region
      // Predicated region
      $region25: #{downsampling_conv_block.1} parent=23 // pred_check
        %p144 = pneg %p43
      $region26: #{downsampling_conv_block.1} parent=23 // pred_check_branch
        %146 = sbr.rel (%p144) target = $region28
      $region27: #{downsampling_conv_block.1} parent=23 // pred_region
        %s147 = smul.u32 4, %s17
        %p148 = scmp.lt.s32.totalorder %s16, 1
        %s149 = scalar_select %p148, %s16, 1
        %p150 = scmp.lt.s32.totalorder %s147, 3
        %s151 = scalar_select %p150, %s147, 3
        %s152 = smul.addr %s149, 16
        %s153 = sadd.s32 %s151, %s152
        %s154 = smul.addr %s153, 4
        %s155 = scalar_lea.vmem %s0, %s154
        %s156 = smul.u32 4, %s17
      $region28: #{downsampling_conv_block.1} parent=23 // pred_fallthru
        _
    $region24: #{downsampling_conv_block.1} parent=5 // pred_fallthru
      _
    %p157 = scmp.le.s32.totalorder 1, %s9
    %p158 = scmp.lt.s32.totalorder %s9, 3
    %p159 = pnand %p157, %p158
    %p160 = pneg %p159
    // Predicated region
    $region29: #{downsampling_conv_block.1} parent=5 // pred_check
      _
    $region30: #{downsampling_conv_block.1} parent=5 // pred_check_branch
      %162 = sbr.rel (%p159) target = $region32
    $region31: #{downsampling_conv_block.1} parent=5 // pred_region
      %s163 = ssub.s32 %s9, 1
      %s164 = smul.u32 4, %s19
      %p165 = scmp.lt.s32.totalorder %s18, 1
      %s166 = scalar_select %p165, %s18, 1
      %p167 = scmp.lt.s32.totalorder %s164, 3
      %s168 = scalar_select %p167, %s164, 3
      %s169 = smul.addr %s166, 16
      %s170 = sadd.s32 %s168, %s169
      %s171 = smul.addr %s170, 4
      %s172 = scalar_lea.vmem %s0, %s171
      %p173 = pneg %p49
      %p174 = pneg %p46
      %p175 = pneg %p70
      %p176 = pneg %p67
      %p177 = pneg %p91
      %p178 = pneg %p88
      %p179 = pneg %p119
      %p180 = pneg %p116
      %s181 = smul.u32 4, %s19
      %p182 = scmp.lt.s32.totalorder %s18, 1
      %s183 = scalar_select %p182, %s18, 1
      %p184 = scmp.lt.s32.totalorder %s181, 3
      %s185 = scalar_select %p184, %s181, 3
      %s186 = smul.addr %s183, 4
      %s187 = sadd.s32 %s185, %s186
      %s188 = smul.addr %s187, 8
      %s189 = scalar_lea.vmem %s3, %s188
      %s190 = smul.u32 4, %s19
      %p191 = scmp.lt.s32.totalorder %s18, 1
      %s192 = scalar_select %p191, %s18, 1
      %p193 = scmp.lt.s32.totalorder %s190, 3
      %s194 = scalar_select %p193, %s190, 3
      %s195 = smul.addr %s192, 16
      %s196 = sadd.s32 %s194, %s195
      %s197 = smul.addr %s196, 4
      %s198 = scalar_lea.vmem %s0, %s197
      %s199 = smul.u32 4, %s19
      %s200 = smul.u32 4, %s19
      %p201 = scmp.lt.s32.totalorder %s18, 1
      %s202 = scalar_select %p201, %s18, 1
      %p203 = scmp.lt.s32.totalorder %s200, 3
      %s204 = scalar_select %p203, %s200, 3
      %s205 = smul.addr %s202, 4
      %s206 = sadd.s32 %s204, %s205
      %s207 = smul.addr %s206, 8
      %s208 = scalar_lea.vmem %s3, %s207
      %s209 = smul.u32 4, %s19
      %v211 = vld [vmem:[%s1] sm:$0xf]
      %v212 = vld [vmem:[%s198] sm:$0xff]
      %v213 = vld [vmem:[%s198 + $0x8] sm:$0xff]
      %v214 = vld [vmem:[%s198 + $0x10] sm:$0xff]
      %v215 = vld [vmem:[%s198 + $0x18] sm:$0xff]
      %v216 = vld [vmem:[%s198 + $0x20] sm:$0xff]
      %v217 = vld [vmem:[%s198 + $0x28] sm:$0xff]
      %v218 = vld [vmem:[%s198 + $0x30] sm:$0xff]
      %v219 = vld [vmem:[%s198 + $0x38] sm:$0xff]
      %v220 = vld [vmem:[%s2] sm:$0xff]
      %222 = vset.pattern.permute.xlu0 0
      %223 = vperm.xlu0 %222, %v220
      %v224 = vpop.permute.xlu0 %223
      %v234 = vunpack.c.l.b16 %v212
      %v235 = vunpack.c.h.b16 %v212
      %v236 = vunpack.c.l.b16 %v213
      %v237 = vunpack.c.h.b16 %v213
      %v238 = vunpack.c.l.b16 %v214
      %v239 = vunpack.c.h.b16 %v214
      %v240 = vunpack.c.l.b16 %v215
      %v241 = vunpack.c.h.b16 %v215
      %v242 = vunpack.c.l.b16 %v216
      %v243 = vunpack.c.h.b16 %v216
      %v244 = vunpack.c.l.b16 %v217
      %v245 = vunpack.c.h.b16 %v217
      %v246 = vunpack.c.l.b16 %v218
      %v247 = vunpack.c.h.b16 %v218
      %v248 = vunpack.c.l.b16 %v219
      %v249 = vunpack.c.h.b16 %v219
      %v250 = vpack.c.b16 %v238, %v234
      %v251 = vpack.c.b16 %v239, %v235
      %v252 = vpack.c.b16 %v240, %v236
      %v253 = vpack.c.b16 %v241, %v237
      %v254 = vpack.c.b16 %v246, %v242
      %v255 = vpack.c.b16 %v247, %v243
      %v256 = vpack.c.b16 %v248, %v244
      %v257 = vpack.c.b16 %v249, %v245
      %vm266 = vcmask 261120
      %v268 = vsel %vm266, %v211, 0
      %270 = vmatprep.subr.bf16.mxu0 %v251
      %271 = vmatpush1.bf16.msra.mxu0 %v250
      %272 = vmatprep.subr.bf16.mxu0 %v255
      %273 = vmatpush1.bf16.msra.mxu0 %v254
      %274 = vmatprep.subr.bf16.mxu0 0
      %275 = vmatpush1.bf16.msra.mxu0 0
      %276 = vmatprep.subr.bf16.mxu0 0
      %277 = vmatpush1.bf16.msra.mxu0 0
      %278 = vmatprep.subr.bf16.mxu0 0
      %279 = vmatpush1.bf16.msra.mxu0 0
      %280 = vmatprep.subr.bf16.mxu0 0
      %281 = vmatpush1.bf16.msra.mxu0 0
      %282 = vmatprep.subr.bf16.mxu0 0
      %283 = vmatpush1.bf16.msra.mxu0 0
      %284 = vmatprep.subr.bf16.mxu0 0
      %285 = vmatpush1.bf16.msra.mxu0 0
      %286 = vmatprep.subr.bf16.mxu0 0
      %287 = vmatpush1.bf16.msra.mxu0 0
      %288 = vmatprep.subr.bf16.mxu0 0
      %289 = vmatpush1.bf16.msra.mxu0 0
      %290 = vmatprep.subr.bf16.mxu0 0
      %291 = vmatpush1.bf16.msra.mxu0 0
      %292 = vmatprep.subr.bf16.mxu0 0
      %293 = vmatpush1.bf16.msra.mxu0 0
      %294 = vmatprep.subr.bf16.mxu0 0
      %295 = vmatpush1.bf16.msra.mxu0 0
      %296 = vmatprep.subr.bf16.mxu0 0
      %297 = vmatpush1.bf16.msra.mxu0 0
      %298 = vmatprep.subr.bf16.mxu0 0
      %299 = vmatpush1.bf16.msra.mxu0 0
      %300 = vmatprep.subr.bf16.mxu0 0
      %301 = vmatpush1.bf16.msra.mxu0 0
      %302 = vmatprep.mubr.bf16.mxu0 0
      %303 = vmatmul.mubr.bf16.gmra.mrb[0].mxu0 %v268
      %v304 = vpop.f32.mrb[0].mxu0
      %v305 = vadd.f32 %v224, %v304
      %v306 = vpop.f32.mrb[0].mxu0
      %v307 = vadd.f32 %v224, %v306
      %v308 = vpop.f32.mrb[0].mxu0
      %v309 = vpop.f32.mrb[0].mxu0
      %310 = vdwg.mxu0
      %311 = vmatprep.subr.bf16.mxu0 %v253
      %312 = vmatpush1.bf16.msra.mxu0 %v252
      %313 = vmatprep.subr.bf16.mxu0 %v257
      %314 = vmatpush1.bf16.msra.mxu0 %v256
      %315 = vmatprep.subr.bf16.mxu0 0
      %316 = vmatpush1.bf16.msra.mxu0 0
      %317 = vmatprep.subr.bf16.mxu0 0
      %318 = vmatpush1.bf16.msra.mxu0 0
      %319 = vmatprep.subr.bf16.mxu0 0
      %320 = vmatpush1.bf16.msra.mxu0 0
      %321 = vmatprep.subr.bf16.mxu0 0
      %322 = vmatpush1.bf16.msra.mxu0 0
      %323 = vmatprep.subr.bf16.mxu0 0
      %324 = vmatpush1.bf16.msra.mxu0 0
      %325 = vmatprep.subr.bf16.mxu0 0
      %326 = vmatpush1.bf16.msra.mxu0 0
      %327 = vmatprep.subr.bf16.mxu0 0
      %328 = vmatpush1.bf16.msra.mxu0 0
      %329 = vmatprep.subr.bf16.mxu0 0
      %330 = vmatpush1.bf16.msra.mxu0 0
      %331 = vmatprep.subr.bf16.mxu0 0
      %332 = vmatpush1.bf16.msra.mxu0 0
      %333 = vmatprep.subr.bf16.mxu0 0
      %334 = vmatpush1.bf16.msra.mxu0 0
      %335 = vmatprep.subr.bf16.mxu0 0
      %336 = vmatpush1.bf16.msra.mxu0 0
      %337 = vmatprep.subr.bf16.mxu0 0
      %338 = vmatpush1.bf16.msra.mxu0 0
      %339 = vmatprep.subr.bf16.mxu0 0
      %340 = vmatpush1.bf16.msra.mxu0 0
      %341 = vmatprep.subr.bf16.mxu0 0
      %342 = vmatpush1.bf16.msra.mxu0 0
      %343 = vmatprep.mubr.bf16.mxu0 0
      %344 = vmatmul.mubr.bf16.gmra.mrb[0].mxu0 %v268
      %v345 = vpop.f32.mrb[0].mxu0
      %v346 = vadd.f32 %v224, %v345
      %v347 = vpop.f32.mrb[0].mxu0
      %v348 = vadd.f32 %v224, %v347
      %v349 = vpop.f32.mrb[0].mxu0
      %v350 = vpop.f32.mrb[0].mxu0
      %351 = vdwg.mxu0
      %v352 = vmax.f32 %v305, 0.0
      %v353 = vmax.f32 %v307, 0.0
      %v354 = vmax.f32 %v346, 0.0
      %v355 = vmax.f32 %v348, 0.0
      %356 = vst [vmem:[%s208] sm:$0xff] %v352
      %357 = vst [vmem:[%s208 + $0x8] sm:$0xff] %v353
      %358 = vst [vmem:[%s208 + $0x10] sm:$0xff] %v354
      %359 = vst [vmem:[%s208 + $0x18] sm:$0xff] %v355
      %s360 = smul.u32 4, %s19
      %p361 = scmp.lt.s32.totalorder %s18, 1
      %s362 = scalar_select %p361, %s18, 1
      %p363 = scmp.lt.s32.totalorder %s360, 3
      %s364 = scalar_select %p363, %s360, 3
      %s365 = smul.addr %s362, 4
      %s366 = sadd.s32 %s364, %s365
      %s367 = smul.addr %s366, 8
      %s368 = scalar_lea.vmem %s3, %s367
      // Predicated region
      $region33: #{downsampling_conv_block.1} parent=31 // pred_check
        %p369 = pneg %p116
      $region34: #{downsampling_conv_block.1} parent=31 // pred_check_branch
        %371 = sbr.rel (%p369) target = $region36
      $region35: #{downsampling_conv_block.1} parent=31 // pred_region
        %s372 = smul.u32 4, %s19
      $region36: #{downsampling_conv_block.1} parent=31 // pred_fallthru
        _
    $region32: #{downsampling_conv_block.1} parent=5 // pred_fallthru
      _
    %p373 = scmp.le.s32.totalorder 2, %s9
    // Predicated region
    $region37: #{downsampling_conv_block.1} parent=5 // pred_check
      %p374 = pneg %p373
    $region38: #{downsampling_conv_block.1} parent=5 // pred_check_branch
      %376 = sbr.rel (%p374) target = $region40
    $region39: #{downsampling_conv_block.1} parent=5 // pred_region
      %s377 = ssub.s32 %s9, 2
      // Predicated region
      $region41: #{downsampling_conv_block.1} parent=39 // pred_check
        %p378 = pneg %p122
      $region42: #{downsampling_conv_block.1} parent=39 // pred_check_branch
        %380 = sbr.rel (%p378) target = $region44
      $region43: #{downsampling_conv_block.1} parent=39 // pred_region
        %s381 = smul.u32 4, %s21
        %p382 = scmp.lt.s32.totalorder %s20, 1
        %s383 = scalar_select %p382, %s20, 1
        %p384 = scmp.lt.s32.totalorder %s381, 3
        %s385 = scalar_select %p384, %s381, 3
        %s386 = smul.addr %s383, 4
        %s387 = sadd.s32 %s385, %s386
        %s388 = smul.addr %s387, 8
        %s389 = scalar_lea.vmem %s3, %s388
      $region44: #{downsampling_conv_block.1} parent=39 // pred_fallthru
        _
    $region40: #{downsampling_conv_block.1} parent=5 // pred_fallthru
      _
  $region6: #{downsampling_conv_block.1} parent=0 // loop_footer
    %s13 = sadd.s32 1, %s9
  $region7: #{downsampling_conv_block.1} parent=0 // loop_footer_branch
    %8 = sbr.rel target = $region3
  $region8: #{downsampling_conv_block.1} parent=0 // loop_exit
    _

</llo_original>
